<compile_context>
chip_gen: v5e
topology: v5e:2x2
jax: 0.10.0
libtpu: 0.0.40
codegen_flags: <defaults>
</compile_context>

<pallas_src>
import functools

import jax
import jax.numpy as jnp
from jax import lax
from jax.experimental import pallas as pl
from jax.experimental.pallas import tpu as pltpu


def _choose_tile(dim, preferred, align):
    """Full dim if it already fits, else the largest align-multiple <= preferred."""
    if dim <= preferred:
        return dim
    return max(align, (preferred // align) * align)


def _block_diag_mask(h, d, dtype):
    """(h*d, h*d) 0/1 matrix with ones on the h diagonal (d, d) blocks."""
    idx = jnp.arange(h * d) // d
    return (idx[:, None] == idx[None, :]).astype(dtype)


# ----------------------------------------------------------------------------
# Tiled, pipelined linear:  y = x @ W^T + b   (K-tiled with f32 accumulator)
# ----------------------------------------------------------------------------
def _make_linear_kernel(compute_dtype):
    def kernel(x_ref, w_ref, b_ref, o_ref, acc_ref):
        # x: (TM, TK), w: (TN, TK) [already compute_dtype], b: (1, TN) f32
        @pl.when(pl.program_id(2) == 0)
        def _():
            acc_ref[...] = jnp.zeros_like(acc_ref)

        acc_ref[...] += lax.dot_general(
            x_ref[...].astype(compute_dtype), w_ref[...],
            dimension_numbers=(((1,), (1,)), ((), ())),   # contract d_in; W^T folded in
            preferred_element_type=jnp.float32)

        @pl.when(pl.program_id(2) == pl.num_programs(2) - 1)
        def _():
            o_ref[...] = (acc_ref[...] + b_ref[...]).astype(o_ref.dtype)

    return kernel


def pallas_linear(x2d, weight, bias, *, compute_dtype=jnp.bfloat16, out_dtype=None,
                  tm_pref=512, tn_pref=256, tk_pref=512):
    """x2d: (N, d_in); weight: (d_out, d_in); bias: (d_out,) -> (N, d_out)."""
    n, d_in = x2d.shape
    d_out = weight.shape[0]
    out_dtype = out_dtype if out_dtype is not None else x2d.dtype
    tm = _choose_tile(n, tm_pref, 16)       # 256-aligned by default; bf16 sublane ok
    tn = _choose_tile(d_out, tn_pref, 128)  # lane-aligned output tile
    tk = _choose_tile(d_in, tk_pref, 128)   # reduction tile -> VMEM O(tile), v7x safe

    w_c = weight.astype(compute_dtype)      # cast W once in HBM (halves weight traffic)
    bias2d = bias.reshape(1, d_out).astype(jnp.float32)

    cost = pl.CostEstimate(
        flops=2 * n * d_out * d_in,
        transcendentals=0,
        bytes_accessed=(n * d_in * jnp.dtype(x2d.dtype).itemsize
                        + d_out * d_in * jnp.dtype(compute_dtype).itemsize
                        + d_out * 4
                        + n * d_out * jnp.dtype(out_dtype).itemsize),
    )
    # NOTE: weights are re-streamed once per row tile; fine for the projection
    # shapes here (W is small relative to activations).
    return pl.pallas_call(
        _make_linear_kernel(compute_dtype),
        out_shape=jax.ShapeDtypeStruct((n, d_out), out_dtype),
        grid_spec=pltpu.PrefetchScalarGridSpec(
            num_scalar_prefetch=0,
            grid=(pl.cdiv(n, tm), pl.cdiv(d_out, tn), pl.cdiv(d_in, tk)),
            in_specs=[
                pl.BlockSpec((tm, tk), lambda i, j, k: (i, k)),
                pl.BlockSpec((tn, tk), lambda i, j, k: (j, k)),
                pl.BlockSpec((1, tn), lambda i, j, k: (0, j)),
            ],
            out_specs=pl.BlockSpec((tm, tn), lambda i, j, k: (i, j)),
            scratch_shapes=[pltpu.VMEM((tm, tn), jnp.float32)],
        ),
        compiler_params=pltpu.CompilerParams(
            dimension_semantics=("parallel", "parallel", "arbitrary"),
            vmem_limit_bytes=64 * 1024 * 1024),
        cost_estimate=cost,
    )(x2d, w_c, bias2d)


# ----------------------------------------------------------------------------
# UFO attention core.
#   grid = (batch, q_tiles); per batch the block-diagonal, normalized,
#   gamma^2-scaled matrix M = blockdiag_h(gamma_h^2 * kv_norm_h^T) is built
#   once (q_tile == 0) into a VMEM scratch and reused by every q tile.
# ----------------------------------------------------------------------------
def _make_ufo_attn_kernel(compute_dtype):
    def kernel(e_ref, g2_ref, q_ref, k_ref, v_ref, o_ref, m_ref):
        # e_ref : (h*d, h*d) block-diagonal 0/1 indicator (compute_dtype)
        # g2_ref: (1, h*d) per-column gamma_h^2 (f32)
        # q_ref : (tq, h*d), k_ref/v_ref: (nk, h*d), o_ref: (tq, h*d)
        # m_ref : VMEM scratch (h*d, h*d), persists across q tiles of a batch.
        qi = pl.program_id(1)

        @pl.when(qi == 0)
        def _():
            # One wide MXU matmul for all heads: vk = v^T @ k  (h*d_v, h*d_k).
            # The diagonal (d, d) block of head h equals kv_h^T = (k_h^T v_h)^T.
            vk = lax.dot_general(
                v_ref[...].astype(compute_dtype), k_ref[...].astype(compute_dtype),
                dimension_numbers=(((0,), (0,)), ((), ())),
                preferred_element_type=jnp.float32)
            vk_bd = vk * e_ref[...].astype(jnp.float32)        # keep diagonal blocks
            # Column-wise ||kv_h row||^2 (off-diagonal already zero).
            colsq = jnp.sum(vk_bd * vk_bd, axis=0, keepdims=True)   # (1, h*d)
            # NOTE: like the PyTorch reference there is no epsilon -> all-zero
            # kv rows produce inf/NaN (matches reference semantics).
            scale = g2_ref[...] * lax.rsqrt(colsq)             # gamma^2 / ||kv row||
            m_ref[...] = (vk_bd * scale).astype(compute_dtype)

        # Per-head q row norms via MXU: (q*q) @ E gives the segmented sums
        # already broadcast to full lane width (no masked XLU reductions).
        q = q_ref[...].astype(jnp.float32)
        q2 = (q * q).astype(compute_dtype)
        ssum = lax.dot_general(
            q2, e_ref[...], dimension_numbers=(((1,), (0,)), ((), ())),
            preferred_element_type=jnp.float32)                # (tq, h*d)
        q_n = (q * lax.rsqrt(ssum)).astype(compute_dtype)
        # Single wide, lane-dense output matmul + full-width store.
        out = lax.dot_general(
            q_n, m_ref[...], dimension_numbers=(((1,), (0,)), ((), ())),
            preferred_element_type=jnp.float32)                # (tq, h*d)
        o_ref[...] = out.astype(o_ref.dtype)

    return kernel


def pallas_ufo_attention_core(q, k, v, gamma, *, h, d_k, d_v,
                              compute_dtype=jnp.bfloat16, out_dtype=None, tq_pref=512):
    """q: (b, nq, h*d_k), k: (b, nk, h*d_k), v: (b, nk, h*d_v), gamma: (h,)
       -> (b, nq, h*d_v); everything stays head-major / lane-dense."""
    assert d_k == d_v, "UFOAttention requires d_k == d_v"
    b, nq, hdk = q.shape
    nk = k.shape[1]
    hdv = v.shape[2]
    out_dtype = out_dtype if out_dtype is not None else q.dtype
    tq = _choose_tile(nq, tq_pref, 16)

    e_mat = _block_diag_mask(h, d_k, compute_dtype)                  # (h*d, h*d)
    g2row = jnp.repeat(gamma.astype(jnp.float32) ** 2, d_k).reshape(1, hdk)

    cost = pl.CostEstimate(
        flops=2 * b * (nk * hdv * hdk + nq * hdk * hdk + nq * hdk * hdv),
        transcendentals=b * (hdk + nq * hdk),
        bytes_accessed=(jnp.dtype(q.dtype).itemsize
                        * b * (nq * hdk + nk * hdk + nk * hdv + nq * hdv)
                        + hdk * hdk * jnp.dtype(compute_dtype).itemsize + hdk * 4),
    )
    return pl.pallas_call(
        _make_ufo_attn_kernel(compute_dtype),
        out_shape=jax.ShapeDtypeStruct((b, nq, hdv), out_dtype),
        grid_spec=pltpu.PrefetchScalarGridSpec(
            num_scalar_prefetch=0,
            grid=(b, pl.cdiv(nq, tq)),
            in_specs=[
                pl.BlockSpec((hdk, hdk), lambda bi, qi: (0, 0)),       # E (resident)
                pl.BlockSpec((1, hdk), lambda bi, qi: (0, 0)),         # gamma^2 per col
                pl.BlockSpec((None, tq, hdk), lambda bi, qi: (bi, qi, 0)),
                pl.BlockSpec((None, nk, hdk), lambda bi, qi: (bi, 0, 0)),
                pl.BlockSpec((None, nk, hdv), lambda bi, qi: (bi, 0, 0)),
            ],
            out_specs=pl.BlockSpec((None, tq, hdv), lambda bi, qi: (bi, qi, 0)),
            scratch_shapes=[pltpu.VMEM((hdv, hdk), compute_dtype)],    # cached M
        ),
        compiler_params=pltpu.CompilerParams(
            # batch "parallel" (v7x megacore); q-tile "arbitrary" so the
            # per-batch M cache in scratch is honored.
            dimension_semantics=("parallel", "arbitrary"),
            vmem_limit_bytes=64 * 1024 * 1024),
        cost_estimate=cost,
    )(e_mat, g2row, q, k, v)


# ----------------------------------------------------------------------------
# UFOAttention forward (Pallas-backed)
# ----------------------------------------------------------------------------
def ufo_attention_forward(params, queries, keys, values, *, h, d_k, d_v,
                          compute_dtype=jnp.bfloat16):
    # The algorithm (q_norm @ kv_norm^T) implicitly requires d_k == d_v.
    assert d_k == d_v, "UFOAttention requires d_k == d_v"
    b_s, nq, _ = queries.shape
    nk = keys.shape[1]

    q = pallas_linear(queries.reshape(b_s * nq, -1), params["wq"], params["bq"],
                      compute_dtype=compute_dtype, out_dtype=compute_dtype)
    k = pallas_linear(keys.reshape(b_s * nk, -1), params["wk"], params["bk"],
                      compute_dtype=compute_dtype, out_dtype=compute_dtype)
    v = pallas_linear(values.reshape(b_s * nk, -1), params["wv"], params["bv"],
                      compute_dtype=compute_dtype, out_dtype=compute_dtype)

    # Keep head-major (b, seq, h*d): no (b, h, ...) HBM transposes.
    q = q.reshape(b_s, nq, h * d_k)
    k = k.reshape(b_s, nk, h * d_k)
    v = v.reshape(b_s, nk, h * d_v)

    gamma = params["gamma"].reshape(h)               # (1,h,1,1) -> (h,)
    out = pallas_ufo_attention_core(q, k, v, gamma, h=h, d_k=d_k, d_v=d_v,
                                    compute_dtype=compute_dtype)

    out = pallas_linear(out.reshape(b_s * nq, h * d_v), params["wo"], params["bo"],
                        compute_dtype=compute_dtype, out_dtype=queries.dtype)
    return out.reshape(b_s, nq, -1)
    # NOTE: nn.Dropout is defined in __init__ but never applied in forward -> no-op.


# ----------------------------------------------------------------------------
# Pure-JAX reference (mirrors the PyTorch forward exactly, full f32 precision)
# ----------------------------------------------------------------------------
def ufo_attention_reference(params, queries, keys, values, *, h, d_k, d_v):
    hp = lax.Precision.HIGHEST

    def lin(x, w, b):
        return jnp.matmul(x, w.T, precision=hp) + b

    b_s, nq, _ = queries.shape
    nk = keys.shape[1]
    q = lin(queries, params["wq"], params["bq"]).reshape(b_s, nq, h, d_k).transpose(0, 2, 1, 3)
    k = lin(keys, params["wk"], params["bk"]).reshape(b_s, nk, h, d_k).transpose(0, 2, 3, 1)
    v = lin(values, params["wv"], params["bv"]).reshape(b_s, nk, h, d_v).transpose(0, 2, 1, 3)

    gamma = params["gamma"]  # (1, h, 1, 1)
    kv = jnp.einsum("bhdn,bhnv->bhdv", k, v, precision=hp)

    def xnorm(x, g):
        n = jnp.sqrt(jnp.sum(x * x, axis=-1, keepdims=True))
        return x * g / n

    kv_n = xnorm(kv, gamma)
    q_n = xnorm(q, gamma)
    out = jnp.einsum("bhqd,bhvd->bhqv", q_n, kv_n, precision=hp)
    out = out.transpose(0, 2, 1, 3).reshape(b_s, nq, h * d_v)
    return lin(out, params["wo"], params["bo"])


# ----------------------------------------------------------------------------
# Deterministic parameter init (matches module __init__ shapes / init_weights)
# ----------------------------------------------------------------------------
def init_params(key, d_model, d_k, d_v, h):
    ks = jax.random.split(key, 5)
    std = 0.001  # nn.Linear weights: normal(std=0.001), bias = 0
    return {
        "wq": std * jax.random.normal(ks[0], (h * d_k, d_model), jnp.float32),
        "bq": jnp.zeros((h * d_k,), jnp.float32),
        "wk": std * jax.random.normal(ks[1], (h * d_k, d_model), jnp.float32),
        "bk": jnp.zeros((h * d_k,), jnp.float32),
        "wv": std * jax.random.normal(ks[2], (h * d_v, d_model), jnp.float32),
        "bv": jnp.zeros((h * d_v,), jnp.float32),
        "wo": std * jax.random.normal(ks[3], (d_model, h * d_v), jnp.float32),
        "bo": jnp.zeros((d_model,), jnp.float32),
        "gamma": jax.random.normal(ks[4], (1, h, 1, 1), jnp.float32),
    }


if __name__ == "__main__":
    # Small shapes consistent with the module (d_k == d_v required by the math).
    b_s, nq, nk = 2, 8, 8
    d_model, d_k, d_v, h = 32, 16, 16, 4

    key = jax.random.PRNGKey(0)
    kq, kk, kv_, kp = jax.random.split(key, 4)
    queries = jax.random.normal(kq, (b_s, nq, d_model), jnp.float32)
    keys = jax.random.normal(kk, (b_s, nk, d_model), jnp.float32)
    values = jax.random.normal(kv_, (b_s, nk, d_model), jnp.float32)

    params = init_params(kp, d_model, d_k, d_v, h)
    ref = ufo_attention_reference(params, queries, keys, values, h=h, d_k=d_k, d_v=d_v)

    # 1) Structural correctness check: f32 compute path, tight-ish tolerance.
    fwd_f32 = jax.jit(functools.partial(ufo_attention_forward,
                                        h=h, d_k=d_k, d_v=d_v,
                                        compute_dtype=jnp.float32))
    out_f32 = jax.block_until_ready(fwd_f32(params, queries, keys, values))
    assert out_f32.shape == (b_s, nq, d_model), out_f32.shape
    err_f32 = float(jnp.max(jnp.abs(out_f32 - ref)))
    assert jnp.allclose(out_f32, ref, atol=5e-4, rtol=5e-3), err_f32

    # 2) Performance path: bf16 MXU operands with f32 accumulation.
    #    Tolerance is intentionally relaxed for bf16 (NOT a silent relaxation).
    fwd_bf16 = jax.jit(functools.partial(ufo_attention_forward,
                                         h=h, d_k=d_k, d_v=d_v,
                                         compute_dtype=jnp.bfloat16))
    out_bf16 = jax.block_until_ready(fwd_bf16(params, queries, keys, values))
    assert out_bf16.shape == (b_s, nq, d_model), out_bf16.shape
    err_bf16 = float(jnp.max(jnp.abs(out_bf16.astype(jnp.float32) - ref)))
    assert jnp.allclose(out_bf16.astype(jnp.float32), ref, atol=2e-3, rtol=1e-1), err_bf16

    print("KERNEL_OK")
</pallas_src>

<mosaic_0001>
module attributes {stable_mosaic.version = 11 : i64} {
  func.func @kernel(%arg0: i32, %arg1: i32, %arg2: i32, %arg3: memref<16x32xf32, #tpu.memory_space<vmem>>, %arg4: memref<64x32xf32, #tpu.memory_space<vmem>>, %arg5: memref<1x64xf32, #tpu.memory_space<vmem>>, %arg6: memref<16x64xf32, #tpu.memory_space<vmem>>, %arg7: memref<16x64xf32, #tpu.memory_space<vmem>>) attributes {dimension_semantics = [#tpu.dimension_semantics<parallel>, #tpu.dimension_semantics<parallel>, #tpu.dimension_semantics<arbitrary>], iteration_bounds = array<i64: 1, 1, 1>, scalar_prefetch = 0 : i64, scratch_operands = 1 : i64, tpu.core_type = #tpu.core_type<tc>, window_params = [{transform_indices = @transform_0, window_bounds = array<i64: 16, 32>}, {transform_indices = @transform_1, window_bounds = array<i64: 64, 32>}, {transform_indices = @transform_2, window_bounds = array<i64: 1, 64>}, {transform_indices = @transform_3, window_bounds = array<i64: 16, 64>}]} {
    %c0_i32 = arith.constant 0 : i32
    %0 = arith.cmpi eq, %arg2, %c0_i32 : i32
    %1 = arith.extui %0 : i1 to i32
    %c0_i32_0 = arith.constant 0 : i32
    %2 = arith.cmpi ne, %1, %c0_i32_0 : i32
    scf.if %2 {
      %cst_10 = arith.constant 0.000000e+00 : f32
      %12 = vector.broadcast %cst_10 : f32 to vector<16x64xf32>
      %c0_11 = arith.constant 0 : index
      %c0_12 = arith.constant 0 : index
      %13 = vector.load %arg7[%c0_11, %c0_12] : memref<16x64xf32, #tpu.memory_space<vmem>>, vector<16x64xf32>
      tpu.vector_store %arg7[%c0_11, %c0_12], %12 {strides = array<i32>} : memref<16x64xf32, #tpu.memory_space<vmem>>, vector<16x64xf32>,
    } else {
    }
    %c0 = arith.constant 0 : index
    %c0_1 = arith.constant 0 : index
    %3 = vector.load %arg7[%c0, %c0_1] : memref<16x64xf32, #tpu.memory_space<vmem>>, vector<16x64xf32>
    %c0_2 = arith.constant 0 : index
    %c0_3 = arith.constant 0 : index
    %4 = vector.load %arg3[%c0_2, %c0_3] : memref<16x32xf32, #tpu.memory_space<vmem>>, vector<16x32xf32>
    %c0_4 = arith.constant 0 : index
    %c0_5 = arith.constant 0 : index
    %5 = vector.load %arg4[%c0_4, %c0_5] : memref<64x32xf32, #tpu.memory_space<vmem>>, vector<64x32xf32>
    %cst = arith.constant dense<0.000000e+00> : vector<16x64xf32>
    %6 = tpu.matmul %4, %5, %cst {dimension_numbers = #tpu.dot_dimension_numbers<[1], [1], [0], [0], [0, 0, 1, 0], [], []>} : vector<16x32xf32>, vector<64x32xf32>, vector<16x64xf32> -> vector<16x64xf32>
    %7 = arith.addf %3, %6 : vector<16x64xf32>
    %c0_6 = arith.constant 0 : index
    %c0_7 = arith.constant 0 : index
    %8 = vector.load %arg7[%c0_6, %c0_7] : memref<16x64xf32, #tpu.memory_space<vmem>>, vector<16x64xf32>
    tpu.vector_store %arg7[%c0_6, %c0_7], %7 {strides = array<i32>} : memref<16x64xf32, #tpu.memory_space<vmem>>, vector<16x64xf32>,
    %c0_i32_8 = arith.constant 0 : i32
    %9 = arith.cmpi eq, %arg2, %c0_i32_8 : i32
    %10 = arith.extui %9 : i1 to i32
    %c0_i32_9 = arith.constant 0 : i32
    %11 = arith.cmpi ne, %10, %c0_i32_9 : i32
    scf.if %11 {
      %c0_10 = arith.constant 0 : index
      %c0_11 = arith.constant 0 : index
      %12 = vector.load %arg7[%c0_10, %c0_11] : memref<16x64xf32, #tpu.memory_space<vmem>>, vector<16x64xf32>
      %c0_12 = arith.constant 0 : index
      %c0_13 = arith.constant 0 : index
      %13 = vector.load %arg5[%c0_12, %c0_13] : memref<1x64xf32, #tpu.memory_space<vmem>>, vector<1x64xf32>
      %14 = vector.broadcast %13 : vector<1x64xf32> to vector<16x64xf32>
      %15 = arith.addf %12, %14 : vector<16x64xf32>
      %c0_14 = arith.constant 0 : index
      %c0_15 = arith.constant 0 : index
      %16 = vector.load %arg6[%c0_14, %c0_15] : memref<16x64xf32, #tpu.memory_space<vmem>>, vector<16x64xf32>
      tpu.vector_store %arg6[%c0_14, %c0_15], %15 {strides = array<i32>} : memref<16x64xf32, #tpu.memory_space<vmem>>, vector<16x64xf32>,
    } else {
    }
    return
  }
  func.func @transform_0(%arg0: i32, %arg1: i32, %arg2: i32) -> (i32, i32) {
    %c0_i32 = arith.constant 0 : i32
    return %arg0, %arg2 : i32, i32
  }
  func.func @transform_1(%arg0: i32, %arg1: i32, %arg2: i32) -> (i32, i32) {
    %c0_i32 = arith.constant 0 : i32
    return %arg1, %arg2 : i32, i32
  }
  func.func @transform_2(%arg0: i32, %arg1: i32, %arg2: i32) -> (i32, i32) {
    %c0_i32 = arith.constant 0 : i32
    %c0_i32_0 = arith.constant 0 : i32
    return %c0_i32, %arg1 : i32, i32
  }
  func.func @transform_3(%arg0: i32, %arg1: i32, %arg2: i32) -> (i32, i32) {
    %c0_i32 = arith.constant 0 : i32
    return %arg0, %arg1 : i32, i32
  }
}

module attributes {stable_mosaic.version = 11 : i64} {
  func.func @kernel(%arg0: i32, %arg1: i32, %arg2: i32, %arg3: memref<16x64xf32, #tpu.memory_space<vmem>>, %arg4: memref<32x64xf32, #tpu.memory_space<vmem>>, %arg5: memref<1x32xf32, #tpu.memory_space<vmem>>, %arg6: memref<16x32xf32, #tpu.memory_space<vmem>>, %arg7: memref<16x32xf32, #tpu.memory_space<vmem>>) attributes {dimension_semantics = [#tpu.dimension_semantics<parallel>, #tpu.dimension_semantics<parallel>, #tpu.dimension_semantics<arbitrary>], iteration_bounds = array<i64: 1, 1, 1>, scalar_prefetch = 0 : i64, scratch_operands = 1 : i64, tpu.core_type = #tpu.core_type<tc>, window_params = [{transform_indices = @transform_0, window_bounds = array<i64: 16, 64>}, {transform_indices = @transform_1, window_bounds = array<i64: 32, 64>}, {transform_indices = @transform_2, window_bounds = array<i64: 1, 32>}, {transform_indices = @transform_3, window_bounds = array<i64: 16, 32>}]} {
    %c0_i32 = arith.constant 0 : i32
    %0 = arith.cmpi eq, %arg2, %c0_i32 : i32
    %1 = arith.extui %0 : i1 to i32
    %c0_i32_0 = arith.constant 0 : i32
    %2 = arith.cmpi ne, %1, %c0_i32_0 : i32
    scf.if %2 {
      %cst_10 = arith.constant 0.000000e+00 : f32
      %12 = vector.broadcast %cst_10 : f32 to vector<16x32xf32>
      %c0_11 = arith.constant 0 : index
      %c0_12 = arith.constant 0 : index
      %13 = vector.load %arg7[%c0_11, %c0_12] : memref<16x32xf32, #tpu.memory_space<vmem>>, vector<16x32xf32>
      tpu.vector_store %arg7[%c0_11, %c0_12], %12 {strides = array<i32>} : memref<16x32xf32, #tpu.memory_space<vmem>>, vector<16x32xf32>,
    } else {
    }
    %c0 = arith.constant 0 : index
    %c0_1 = arith.constant 0 : index
    %3 = vector.load %arg7[%c0, %c0_1] : memref<16x32xf32, #tpu.memory_space<vmem>>, vector<16x32xf32>
    %c0_2 = arith.constant 0 : index
    %c0_3 = arith.constant 0 : index
    %4 = vector.load %arg3[%c0_2, %c0_3] : memref<16x64xf32, #tpu.memory_space<vmem>>, vector<16x64xf32>
    %c0_4 = arith.constant 0 : index
    %c0_5 = arith.constant 0 : index
    %5 = vector.load %arg4[%c0_4, %c0_5] : memref<32x64xf32, #tpu.memory_space<vmem>>, vector<32x64xf32>
    %cst = arith.constant dense<0.000000e+00> : vector<16x32xf32>
    %6 = tpu.matmul %4, %5, %cst {dimension_numbers = #tpu.dot_dimension_numbers<[1], [1], [0], [0], [0, 0, 1, 0], [], []>} : vector<16x64xf32>, vector<32x64xf32>, vector<16x32xf32> -> vector<16x32xf32>
    %7 = arith.addf %3, %6 : vector<16x32xf32>
    %c0_6 = arith.constant 0 : index
    %c0_7 = arith.constant 0 : index
    %8 = vector.load %arg7[%c0_6, %c0_7] : memref<16x32xf32, #tpu.memory_space<vmem>>, vector<16x32xf32>
    tpu.vector_store %arg7[%c0_6, %c0_7], %7 {strides = array<i32>} : memref<16x32xf32, #tpu.memory_space<vmem>>, vector<16x32xf32>,
    %c0_i32_8 = arith.constant 0 : i32
    %9 = arith.cmpi eq, %arg2, %c0_i32_8 : i32
    %10 = arith.extui %9 : i1 to i32
    %c0_i32_9 = arith.constant 0 : i32
    %11 = arith.cmpi ne, %10, %c0_i32_9 : i32
    scf.if %11 {
      %c0_10 = arith.constant 0 : index
      %c0_11 = arith.constant 0 : index
      %12 = vector.load %arg7[%c0_10, %c0_11] : memref<16x32xf32, #tpu.memory_space<vmem>>, vector<16x32xf32>
      %c0_12 = arith.constant 0 : index
      %c0_13 = arith.constant 0 : index
      %13 = vector.load %arg5[%c0_12, %c0_13] : memref<1x32xf32, #tpu.memory_space<vmem>>, vector<1x32xf32>
      %14 = vector.broadcast %13 : vector<1x32xf32> to vector<16x32xf32>
      %15 = arith.addf %12, %14 : vector<16x32xf32>
      %c0_14 = arith.constant 0 : index
      %c0_15 = arith.constant 0 : index
      %16 = vector.load %arg6[%c0_14, %c0_15] : memref<16x32xf32, #tpu.memory_space<vmem>>, vector<16x32xf32>
      tpu.vector_store %arg6[%c0_14, %c0_15], %15 {strides = array<i32>} : memref<16x32xf32, #tpu.memory_space<vmem>>, vector<16x32xf32>,
    } else {
    }
    return
  }
  func.func @transform_0(%arg0: i32, %arg1: i32, %arg2: i32) -> (i32, i32) {
    %c0_i32 = arith.constant 0 : i32
    return %arg0, %arg2 : i32, i32
  }
  func.func @transform_1(%arg0: i32, %arg1: i32, %arg2: i32) -> (i32, i32) {
    %c0_i32 = arith.constant 0 : i32
    return %arg1, %arg2 : i32, i32
  }
  func.func @transform_2(%arg0: i32, %arg1: i32, %arg2: i32) -> (i32, i32) {
    %c0_i32 = arith.constant 0 : i32
    %c0_i32_0 = arith.constant 0 : i32
    return %c0_i32, %arg1 : i32, i32
  }
  func.func @transform_3(%arg0: i32, %arg1: i32, %arg2: i32) -> (i32, i32) {
    %c0_i32 = arith.constant 0 : i32
    return %arg0, %arg1 : i32, i32
  }
}

module attributes {stable_mosaic.version = 11 : i64} {
  func.func @kernel(%arg0: i32, %arg1: i32, %arg2: memref<64x64xf32, #tpu.memory_space<vmem>>, %arg3: memref<1x64xf32, #tpu.memory_space<vmem>>, %arg4: memref<1x8x64xf32, #tpu.memory_space<vmem>>, %arg5: memref<1x8x64xf32, #tpu.memory_space<vmem>>, %arg6: memref<1x8x64xf32, #tpu.memory_space<vmem>>, %arg7: memref<1x8x64xf32, #tpu.memory_space<vmem>>, %arg8: memref<64x64xf32, #tpu.memory_space<vmem>>) attributes {dimension_semantics = [#tpu.dimension_semantics<parallel>, #tpu.dimension_semantics<arbitrary>], iteration_bounds = array<i64: 2, 1>, scalar_prefetch = 0 : i64, scratch_operands = 1 : i64, tpu.core_type = #tpu.core_type<tc>, window_params = [{pipeline_mode = #tpu.pipeline_mode<synchronous>, transform_indices = @transform_0, window_bounds = array<i64: 64, 64>}, {pipeline_mode = #tpu.pipeline_mode<synchronous>, transform_indices = @transform_1, window_bounds = array<i64: 1, 64>}, {transform_indices = @transform_2, window_bounds = array<i64: 1, 8, 64>}, {transform_indices = @transform_3, window_bounds = array<i64: 1, 8, 64>}, {transform_indices = @transform_4, window_bounds = array<i64: 1, 8, 64>}, {transform_indices = @transform_5, window_bounds = array<i64: 1, 8, 64>}]} {
    %c0_i32 = arith.constant 0 : i32
    %0 = arith.cmpi eq, %arg1, %c0_i32 : i32
    %1 = arith.extui %0 : i1 to i32
    %c0_i32_0 = arith.constant 0 : i32
    %2 = arith.cmpi ne, %1, %c0_i32_0 : i32
    scf.if %2 {
      %c0_11 = arith.constant 0 : index
      %c0_12 = arith.constant 0 : index
      %c0_13 = arith.constant 0 : index
      %15 = vector.load %arg6[%c0_11, %c0_12, %c0_13] : memref<1x8x64xf32, #tpu.memory_space<vmem>>, vector<1x8x64xf32>
      %16 = vector.shape_cast %15 : vector<1x8x64xf32> to vector<8x64xf32>
      %c0_14 = arith.constant 0 : index
      %c0_15 = arith.constant 0 : index
      %c0_16 = arith.constant 0 : index
      %17 = vector.load %arg5[%c0_14, %c0_15, %c0_16] : memref<1x8x64xf32, #tpu.memory_space<vmem>>, vector<1x8x64xf32>
      %18 = vector.shape_cast %17 : vector<1x8x64xf32> to vector<8x64xf32>
      %cst_17 = arith.constant dense<0.000000e+00> : vector<64x64xf32>
      %19 = tpu.matmul %16, %18, %cst_17 {dimension_numbers = #tpu.dot_dimension_numbers<[0], [0], [1], [1], [0, 1, 1, 1], [], []>} : vector<8x64xf32>, vector<8x64xf32>, vector<64x64xf32> -> vector<64x64xf32>
      %c0_18 = arith.constant 0 : index
      %c0_19 = arith.constant 0 : index
      %20 = vector.load %arg2[%c0_18, %c0_19] : memref<64x64xf32, #tpu.memory_space<vmem>>, vector<64x64xf32>
      %21 = arith.mulf %19, %20 : vector<64x64xf32>
      %22 = arith.mulf %21, %21 : vector<64x64xf32>
      %cst_20 = arith.constant dense<0.000000e+00> : vector<64xf32>
      %23 = vector.multi_reduction <add>, %22, %cst_20 [0] : vector<64x64xf32> to vector<64xf32>
      %24 = vector.shape_cast %23 : vector<64xf32> to vector<1x64xf32>
      %c0_21 = arith.constant 0 : index
      %c0_22 = arith.constant 0 : index
      %25 = vector.load %arg3[%c0_21, %c0_22] : memref<1x64xf32, #tpu.memory_space<vmem>>, vector<1x64xf32>
      %26 = math.rsqrt %24 : vector<1x64xf32>
      %27 = arith.mulf %25, %26 : vector<1x64xf32>
      %28 = vector.broadcast %27 : vector<1x64xf32> to vector<64x64xf32>
      %29 = arith.mulf %21, %28 : vector<64x64xf32>
      %c0_23 = arith.constant 0 : index
      %c0_24 = arith.constant 0 : index
      %30 = vector.load %arg8[%c0_23, %c0_24] : memref<64x64xf32, #tpu.memory_space<vmem>>, vector<64x64xf32>
      tpu.vector_store %arg8[%c0_23, %c0_24], %29 {strides = array<i32>} : memref<64x64xf32, #tpu.memory_space<vmem>>, vector<64x64xf32>,
    } else {
    }
    %c0 = arith.constant 0 : index
    %c0_1 = arith.constant 0 : index
    %c0_2 = arith.constant 0 : index
    %3 = vector.load %arg4[%c0, %c0_1, %c0_2] : memref<1x8x64xf32, #tpu.memory_space<vmem>>, vector<1x8x64xf32>
    %4 = vector.shape_cast %3 : vector<1x8x64xf32> to vector<8x64xf32>
    %5 = arith.mulf %4, %4 : vector<8x64xf32>
    %c0_3 = arith.constant 0 : index
    %c0_4 = arith.constant 0 : index
    %6 = vector.load %arg2[%c0_3, %c0_4] : memref<64x64xf32, #tpu.memory_space<vmem>>, vector<64x64xf32>
    %cst = arith.constant dense<0.000000e+00> : vector<8x64xf32>
    %7 = tpu.matmul %5, %6, %cst {dimension_numbers = #tpu.dot_dimension_numbers<[1], [0], [0], [1], [0, 0, 1, 1], [], []>} : vector<8x64xf32>, vector<64x64xf32>, vector<8x64xf32> -> vector<8x64xf32>
    %8 = math.rsqrt %7 : vector<8x64xf32>
    %9 = arith.mulf %4, %8 : vector<8x64xf32>
    %c0_5 = arith.constant 0 : index
    %c0_6 = arith.constant 0 : index
    %10 = vector.load %arg8[%c0_5, %c0_6] : memref<64x64xf32, #tpu.memory_space<vmem>>, vector<64x64xf32>
    %cst_7 = arith.constant dense<0.000000e+00> : vector<8x64xf32>
    %11 = tpu.matmul %9, %10, %cst_7 {dimension_numbers = #tpu.dot_dimension_numbers<[1], [0], [0], [1], [0, 0, 1, 1], [], []>} : vector<8x64xf32>, vector<64x64xf32>, vector<8x64xf32> -> vector<8x64xf32>
    %c0_8 = arith.constant 0 : index
    %c0_9 = arith.constant 0 : index
    %c0_10 = arith.constant 0 : index
    %12 = vector.load %arg7[%c0_8, %c0_9, %c0_10] : memref<1x8x64xf32, #tpu.memory_space<vmem>>, vector<1x8x64xf32>
    %13 = vector.shape_cast %12 : vector<1x8x64xf32> to vector<8x64xf32>
    %14 = vector.shape_cast %11 : vector<8x64xf32> to vector<1x8x64xf32>
    tpu.vector_store %arg7[%c0_8, %c0_9, %c0_10], %14 {strides = array<i32>} : memref<1x8x64xf32, #tpu.memory_space<vmem>>, vector<1x8x64xf32>,
    return
  }
  func.func @transform_0(%arg0: i32, %arg1: i32) -> (i32, i32) {
    %c0_i32 = arith.constant 0 : i32
    %c0_i32_0 = arith.constant 0 : i32
    %c0_i32_1 = arith.constant 0 : i32
    return %c0_i32, %c0_i32_0 : i32, i32
  }
  func.func @transform_1(%arg0: i32, %arg1: i32) -> (i32, i32) {
    %c0_i32 = arith.constant 0 : i32
    %c0_i32_0 = arith.constant 0 : i32
    %c0_i32_1 = arith.constant 0 : i32
    return %c0_i32, %c0_i32_0 : i32, i32
  }
  func.func @transform_2(%arg0: i32, %arg1: i32) -> (i32, i32, i32) {
    %c0_i32 = arith.constant 0 : i32
    %c0_i32_0 = arith.constant 0 : i32
    return %arg0, %arg1, %c0_i32 : i32, i32, i32
  }
  func.func @transform_3(%arg0: i32, %arg1: i32) -> (i32, i32, i32) {
    %c0_i32 = arith.constant 0 : i32
    %c0_i32_0 = arith.constant 0 : i32
    %c0_i32_1 = arith.constant 0 : i32
    return %arg0, %c0_i32, %c0_i32_0 : i32, i32, i32
  }
  func.func @transform_4(%arg0: i32, %arg1: i32) -> (i32, i32, i32) {
    %c0_i32 = arith.constant 0 : i32
    %c0_i32_0 = arith.constant 0 : i32
    %c0_i32_1 = arith.constant 0 : i32
    return %arg0, %c0_i32, %c0_i32_0 : i32, i32, i32
  }
  func.func @transform_5(%arg0: i32, %arg1: i32) -> (i32, i32, i32) {
    %c0_i32 = arith.constant 0 : i32
    %c0_i32_0 = arith.constant 0 : i32
    return %arg0, %arg1, %c0_i32 : i32, i32, i32
  }
}

</mosaic_0001>

<llo_original>
// kernel: ufo_attention_forward.5
$region0: #{ufo_attention_forward.5}
  #allocation0 [shape = 'u32[]', space=smem, size = 0x4, offset = 0x4, fixed_abs, tag = 'smem constant byte address 0x4 - core index']
  #allocation1 [shape = 'u32[72,128]{1,0:T(1,128)}', space=vmem, size = 0x9000, scoped, tag = 'internal scratch']
  #allocation2 [shape = 'f32[16,64]{1,0:T(8,128)}', space=vmem, size = 0x2000, scoped, tag = 'scratch operand']
  %s0 = inlined_call_operand.vmem [shape: f32[16,32], index: 0, kind: input, shape index: {}]
  %s1 = inlined_call_operand.vmem [shape: f32[64,32], index: 1, kind: input, shape index: {}]
  %s2 = inlined_call_operand.vmem [shape: f32[1,64], index: 2, kind: input, shape index: {}]
  %s3 = inlined_call_operand.vmem [shape: f32[16,64], index: 3, kind: output, shape index: {}]
  %s4 = sld [smem:[#allocation0]]
  $region30: #{ufo_attention_forward.5} parent=0
    _
  %s6 = ssub.s32 1, %s4
  %s7 = scalar_select 0, %s6, %s4
  // Predicated region
  $region2: #{ufo_attention_forward.5} parent=0 // pred_check
    _
  $region3: #{ufo_attention_forward.5} parent=0 // pred_check_branch
    %9 = sbr.rel (0) target = $region5
  $region4: #{ufo_attention_forward.5} parent=0 // pred_region
    _
  $region5: #{ufo_attention_forward.5} parent=0 // pred_fallthru
    _
  // Predicated region
  $region6: #{ufo_attention_forward.5} parent=0 // pred_check
    _
  $region7: #{ufo_attention_forward.5} parent=0 // pred_check_branch
    %11 = sbr.rel (0) target = $region9
  $region8: #{ufo_attention_forward.5} parent=0 // pred_region
    _
  $region9: #{ufo_attention_forward.5} parent=0 // pred_fallthru
    _
  // Predicated region
  $region10: #{ufo_attention_forward.5} parent=0 // pred_check
    _
  $region11: #{ufo_attention_forward.5} parent=0 // pred_check_branch
    %13 = sbr.rel (0) target = $region13
  $region12: #{ufo_attention_forward.5} parent=0 // pred_region
    _
  $region13: #{ufo_attention_forward.5} parent=0 // pred_fallthru
    _
  %p14 = scmp.eq.s32.totalorder 0, 0
  // Predicated region
  $region14: #{ufo_attention_forward.5} parent=0 // pred_check
    %p15 = pneg %p14
  $region15: #{ufo_attention_forward.5} parent=0 // pred_check_branch
    %17 = sbr.rel (%p15) target = $region17
  $region16: #{ufo_attention_forward.5} parent=0 // pred_region
    %vm18 = vcmask 523264
    %19 = vst.msk [vmem:[#allocation2] sm:$0xff] %vm18, 0.0
    %20 = vst.msk [vmem:[#allocation2 + $0x8] sm:$0xff] %vm18, 0.0
  $region17: #{ufo_attention_forward.5} parent=0 // pred_fallthru
    _
  %v21 = vld [vmem:[#allocation2] sm:$0xff]
  %v22 = vld [vmem:[#allocation2 + $0x8] sm:$0xff]
  %v23 = vld [vmem:[%s0] sm:$0xff]
  %v24 = vld [vmem:[%s0 + $0x8] sm:$0xff]
  %v25 = vld [vmem:[%s1] sm:$0xff]
  %v26 = vld [vmem:[%s1 + $0x8] sm:$0xff]
  %v27 = vld [vmem:[%s1 + $0x10] sm:$0xff]
  %v28 = vld [vmem:[%s1 + $0x18] sm:$0xff]
  %v29 = vld [vmem:[%s1 + $0x20] sm:$0xff]
  %v30 = vld [vmem:[%s1 + $0x28] sm:$0xff]
  %v31 = vld [vmem:[%s1 + $0x30] sm:$0xff]
  %v32 = vld [vmem:[%s1 + $0x38] sm:$0xff]
  %vm33 = vcmask 261120
  %v35 = vsel %vm33, %v23, 0
  %v38 = vsel %vm33, %v24, 0
  %v41 = vsel %vm33, %v25, 0
  %v44 = vsel %vm33, %v26, 0
  %v47 = vsel %vm33, %v27, 0
  %v50 = vsel %vm33, %v28, 0
  %v53 = vsel %vm33, %v29, 0
  %v56 = vsel %vm33, %v30, 0
  %v59 = vsel %vm33, %v31, 0
  %v62 = vsel %vm33, %v32, 0
  %64 = vmatpush.xpose.msra.mxu0 0.0
  %65 = vmatpush.xpose.msra.mxu0 0.0
  %66 = vmatpush.xpose.msra.mxu0 0.0
  %67 = vmatpush.xpose.msra.mxu0 0.0
  %68 = vmatpush.xpose.msra.mxu0 0.0
  %69 = vmatpush.xpose.msra.mxu0 0.0
  %70 = vmatpush.xpose.msra.mxu0 0.0
  %71 = vmatpush.xpose.msra.mxu0 0.0
  %72 = vmatpush.xpose.msra.mxu0 %v62
  %73 = vmatpush.xpose.msra.mxu0 %v59
  %74 = vmatpush.xpose.msra.mxu0 %v56
  %75 = vmatpush.xpose.msra.mxu0 %v53
  %76 = vmatpush.xpose.msra.mxu0 %v50
  %77 = vmatpush.xpose.msra.mxu0 %v47
  %78 = vmatpush.xpose.msra.mxu0 %v44
  %79 = vmatpush.xpose.msra.mxu0 %v41
  %80 = vmatmul.f32.gmra.mxu0 %v35
  %v81 = vpop.f32.mrf.mxu0
  %v82 = vadd.f32 0.0, %v81
  %83 = vmatmul.f32.gmra.mxu0 %v38
  %v84 = vpop.f32.mrf.mxu0
  %v85 = vadd.f32 0.0, %v84
  %86 = vdwg.mxu0
  %v87 = vadd.f32 %v21, %v82
  %v88 = vadd.f32 %v22, %v85
  %vm89 = vcmask 523264
  %90 = vst.msk [vmem:[#allocation2] sm:$0xff] %vm89, %v87
  %91 = vst.msk [vmem:[#allocation2 + $0x8] sm:$0xff] %vm89, %v88
  // Predicated region
  $region18: #{ufo_attention_forward.5} parent=0 // pred_check
    %p92 = pneg %p14
  $region19: #{ufo_attention_forward.5} parent=0 // pred_check_branch
    %94 = sbr.rel (%p92) target = $region21
  $region20: #{ufo_attention_forward.5} parent=0 // pred_region
    %v95 = vld [vmem:[#allocation2] sm:$0xff]
    %v96 = vld [vmem:[#allocation2 + $0x8] sm:$0xff]
    %v97 = vld [vmem:[%s2] sm:$0x1]
    %v99 = vperm.slane %v97, 0
    %v101 = vadd.f32 %v95, %v99
    %v102 = vadd.f32 %v96, %v99
    %103 = vst.msk [vmem:[%s3] sm:$0xff] %vm89, %v101
    %104 = vst.msk [vmem:[%s3 + $0x8] sm:$0xff] %vm89, %v102
  $region21: #{ufo_attention_forward.5} parent=0 // pred_fallthru
    _
  // Predicated region
  $region22: #{ufo_attention_forward.5} parent=0 // pred_check
    _
  $region23: #{ufo_attention_forward.5} parent=0 // pred_check_branch
    %106 = sbr.rel (0) target = $region25
  $region24: #{ufo_attention_forward.5} parent=0 // pred_region
    _
  $region25: #{ufo_attention_forward.5} parent=0 // pred_fallthru
    _
  // Predicated region
  $region26: #{ufo_attention_forward.5} parent=0 // pred_check
    _
  $region27: #{ufo_attention_forward.5} parent=0 // pred_check_branch
    %108 = sbr.rel (0) target = $region29
  $region28: #{ufo_attention_forward.5} parent=0 // pred_region
    _
  $region29: #{ufo_attention_forward.5} parent=0 // pred_fallthru
    _

// kernel: ufo_attention_forward.9
$region0: #{ufo_attention_forward.9}
  #allocation0 [shape = 'u32[]', space=smem, size = 0x4, offset = 0x4, fixed_abs, tag = 'smem constant byte address 0x4 - core index']
  #allocation1 [shape = 'u32[72,128]{1,0:T(1,128)}', space=vmem, size = 0x9000, scoped, tag = 'internal scratch']
  #allocation2 [shape = 'f32[16,32]{1,0:T(8,128)}', space=vmem, size = 0x2000, scoped, tag = 'scratch operand']
  %s0 = inlined_call_operand.vmem [shape: f32[16,64], index: 0, kind: input, shape index: {}]
  %s1 = inlined_call_operand.vmem [shape: f32[32,64], index: 1, kind: input, shape index: {}]
  %s2 = inlined_call_operand.vmem [shape: f32[1,32], index: 2, kind: input, shape index: {}]
  %s3 = inlined_call_operand.hbm [shape: f32[16,32], index: 3, kind: output, shape index: {}]
  %s4 = sld [smem:[#allocation0]]
  $region30: #{ufo_attention_forward.9} parent=0
    _
  %s6 = ssub.s32 1, %s4
  %s7 = scalar_select 0, %s6, %s4
  $region1: #{ufo_attention_forward.9} parent=0
    #allocation3 [shape = 'u8[8192]{0}', space=vmem, size = 0x2000, scoped, tag = 'output window, operand 0, single buffered']
    #allocation4 [shape = 's32[1]{0}', space=sflag, size = 0x4, scoped, tag = 'scoped memory for ufo_attention_forward.9']
    %8 = vsyncpa [#allocation4], 0
    // Predicated region
    $region2: #{ufo_attention_forward.9} parent=1 // pred_check
      _
    $region3: #{ufo_attention_forward.9} parent=1 // pred_check_branch
      %10 = sbr.rel (0) target = $region5
    $region4: #{ufo_attention_forward.9} parent=1 // pred_region
      _
    $region5: #{ufo_attention_forward.9} parent=1 // pred_fallthru
      _
    // Predicated region
    $region6: #{ufo_attention_forward.9} parent=1 // pred_check
      _
    $region7: #{ufo_attention_forward.9} parent=1 // pred_check_branch
      %12 = sbr.rel (0) target = $region9
    $region8: #{ufo_attention_forward.9} parent=1 // pred_region
      _
    $region9: #{ufo_attention_forward.9} parent=1 // pred_fallthru
      _
    // Predicated region
    $region10: #{ufo_attention_forward.9} parent=1 // pred_check
      _
    $region11: #{ufo_attention_forward.9} parent=1 // pred_check_branch
      %14 = sbr.rel (0) target = $region13
    $region12: #{ufo_attention_forward.9} parent=1 // pred_region
      _
    $region13: #{ufo_attention_forward.9} parent=1 // pred_fallthru
      _
    %p15 = scmp.eq.s32.totalorder 0, 0
    // Predicated region
    $region14: #{ufo_attention_forward.9} parent=1 // pred_check
      %p16 = pneg %p15
    $region15: #{ufo_attention_forward.9} parent=1 // pred_check_branch
      %18 = sbr.rel (%p16) target = $region17
    $region16: #{ufo_attention_forward.9} parent=1 // pred_region
      %vm19 = vcmask 261120
      %20 = vst.msk [vmem:[#allocation2] sm:$0xff] %vm19, 0.0
      %21 = vst.msk [vmem:[#allocation2 + $0x8] sm:$0xff] %vm19, 0.0
    $region17: #{ufo_attention_forward.9} parent=1 // pred_fallthru
      _
    %v22 = vld [vmem:[#allocation2] sm:$0xff]
    %v23 = vld [vmem:[#allocation2 + $0x8] sm:$0xff]
    %v24 = vld [vmem:[%s0] sm:$0xff]
    %v25 = vld [vmem:[%s0 + $0x8] sm:$0xff]
    %v26 = vld [vmem:[%s1] sm:$0xff]
    %v27 = vld [vmem:[%s1 + $0x8] sm:$0xff]
    %v28 = vld [vmem:[%s1 + $0x10] sm:$0xff]
    %v29 = vld [vmem:[%s1 + $0x18] sm:$0xff]
    %vm30 = vcmask 523264
    %v32 = vsel %vm30, %v24, 0
    %v35 = vsel %vm30, %v25, 0
    %v38 = vsel %vm30, %v26, 0
    %v41 = vsel %vm30, %v27, 0
    %v44 = vsel %vm30, %v28, 0
    %v47 = vsel %vm30, %v29, 0
    %49 = vmatpush.xpose.msra.mxu0 0.0
    %50 = vmatpush.xpose.msra.mxu0 0.0
    %51 = vmatpush.xpose.msra.mxu0 0.0
    %52 = vmatpush.xpose.msra.mxu0 0.0
    %53 = vmatpush.xpose.msra.mxu0 0.0
    %54 = vmatpush.xpose.msra.mxu0 0.0
    %55 = vmatpush.xpose.msra.mxu0 0.0
    %56 = vmatpush.xpose.msra.mxu0 0.0
    %57 = vmatpush.xpose.msra.mxu0 0.0
    %58 = vmatpush.xpose.msra.mxu0 0.0
    %59 = vmatpush.xpose.msra.mxu0 0.0
    %60 = vmatpush.xpose.msra.mxu0 0.0
    %61 = vmatpush.xpose.msra.mxu0 %v47
    %62 = vmatpush.xpose.msra.mxu0 %v44
    %63 = vmatpush.xpose.msra.mxu0 %v41
    %64 = vmatpush.xpose.msra.mxu0 %v38
    %65 = vmatmul.f32.gmra.mxu0 %v32
    %v66 = vpop.f32.mrf.mxu0
    %v67 = vadd.f32 0.0, %v66
    %68 = vmatmul.f32.gmra.mxu0 %v35
    %v69 = vpop.f32.mrf.mxu0
    %v70 = vadd.f32 0.0, %v69
    %71 = vdwg.mxu0
    %v72 = vadd.f32 %v22, %v67
    %v73 = vadd.f32 %v23, %v70
    %vm74 = vcmask 261120
    %75 = vst.msk [vmem:[#allocation2] sm:$0xff] %vm74, %v72
    %76 = vst.msk [vmem:[#allocation2 + $0x8] sm:$0xff] %vm74, %v73
    // Predicated region
    $region18: #{ufo_attention_forward.9} parent=1 // pred_check
      %p77 = pneg %p15
    $region19: #{ufo_attention_forward.9} parent=1 // pred_check_branch
      %79 = sbr.rel (%p77) target = $region21
    $region20: #{ufo_attention_forward.9} parent=1 // pred_region
      %v80 = vld [vmem:[#allocation2] sm:$0xff]
      %v81 = vld [vmem:[#allocation2 + $0x8] sm:$0xff]
      %v82 = vld [vmem:[%s2] sm:$0x1]
      %v84 = vperm.slane %v82, 0
      %v86 = vadd.f32 %v80, %v84
      %v87 = vadd.f32 %v81, %v84
      %88 = vst.msk [vmem:[#allocation3] sm:$0xff] %vm74, %v86
      %89 = vst.msk [vmem:[#allocation3 + $0x8] sm:$0xff] %vm74, %v87
    $region21: #{ufo_attention_forward.9} parent=1 // pred_fallthru
      _
    // Predicated region
    $region22: #{ufo_attention_forward.9} parent=1 // pred_check
      _
    $region23: #{ufo_attention_forward.9} parent=1 // pred_check_branch
      %91 = sbr.rel (0) target = $region25
    $region24: #{ufo_attention_forward.9} parent=1 // pred_region
      %93 = vsyncadd [#allocation4], 0
      %s94 = sshll.u32 [#allocation3], 4
      %s95 = int_to_ptr.vmem [resolvable:$true] %s94
      %s96 = sshll.u32 %s3, 4
      %s97 = int_to_ptr.hbm [resolvable:$true] %s96
      %102 = dma.vmem_to_hbm [thread:$0]  %s95, 256, %s97, [#allocation4], 128, 128, 8
    $region25: #{ufo_attention_forward.9} parent=1 // pred_fallthru
      _
    // Predicated region
    $region26: #{ufo_attention_forward.9} parent=1 // pred_check
      _
    $region27: #{ufo_attention_forward.9} parent=1 // pred_check_branch
      %104 = sbr.rel (0) target = $region29
    $region28: #{ufo_attention_forward.9} parent=1 // pred_region
      %106 = dma.done [#allocation4], 256
    $region29: #{ufo_attention_forward.9} parent=1 // pred_fallthru
      _
    %107 = vsyncpa [#allocation4], 1

// kernel: ufo_attention_forward.8
$region0: #{ufo_attention_forward.8}
  #allocation0 [shape = 'u32[]', space=smem, size = 0x4, offset = 0x4, fixed_abs, tag = 'smem constant byte address 0x4 - core index']
  #allocation1 [shape = 'u32[72,128]{1,0:T(1,128)}', space=vmem, size = 0x9000, scoped, tag = 'internal scratch']
  #allocation2 [shape = 'f32[64,64]{1,0:T(8,128)}', space=vmem, size = 0x8000, scoped, tag = 'scratch operand']
  %s0 = inlined_call_operand.vmem [shape: f32[64,64], index: 0, kind: input, shape index: {}]
  %s1 = inlined_call_operand.vmem [shape: f32[1,64], index: 1, kind: input, shape index: {}]
  %s2 = inlined_call_operand.vmem [shape: f32[2,8,64], index: 2, kind: input, shape index: {}]
  %s3 = inlined_call_operand.vmem [shape: f32[2,8,64], index: 3, kind: input, shape index: {}]
  %s4 = inlined_call_operand.vmem [shape: f32[2,8,64], index: 4, kind: input, shape index: {}]
  %s5 = inlined_call_operand.vmem [shape: f32[2,8,64], index: 5, kind: output, shape index: {}]
  %s6 = sld [smem:[#allocation0]]
  $region57: #{ufo_attention_forward.8} parent=0
    _
  %s8 = ssub.s32 1, %s6
  %s9 = scalar_select 0, %s8, %s6
  loop: start=0, step=1, limit=4
  $region2: #{ufo_attention_forward.8} parent=0 // loop_pre_header
    _
  $region3: #{ufo_attention_forward.8} parent=0 // loop_header
    %s11 = sphi 0, %s15
    %p12 = scmp.ge.s32.totalorder %s11, 4
    %s18 = sphi 0, %s30
    %s19 = sphi 0, %s26
    %s20 = sphi 0, %s18
    %s21 = sphi 0, %s19
    %s22 = sphi 0, %s20
    %s23 = sphi 0, %s21
    %s31 = sphi 0, %s31
    %s33 = sphi 0, %s31
    %s34 = sphi 0, %s33
    %s48 = sphi 0, %s34
    %s52 = sphi 0, %s52
    %s54 = sphi 0, %s52
    %s55 = sphi 0, %s54
    %s69 = sphi 0, %s55
    %s77 = sphi 0, %s79
    %s80 = sphi 0, %s77
    %s81 = sphi 0, %s80
    %s97 = sphi 0, %s81
    %s103 = sphi 0, %s105
    %s106 = sphi 0, %s103
    %s107 = sphi 0, %s106
    %s123 = sphi 0, %s107
    %s129 = sphi 0, %s131
    %s132 = sphi 0, %s129
    %s133 = sphi 0, %s132
    %s149 = sphi 0, %s133
    %s157 = sphi 0, %s159
    %s160 = sphi 0, %s157
    %s161 = sphi 0, %s160
    %s177 = sphi 0, %s161
  $region4: #{ufo_attention_forward.8} parent=0 // loop_header_branch
    %14 = sbr.rel (%p12) target = $region8
  $region5: #{ufo_attention_forward.8} parent=0 // loop_body
    %s16 = ssub.s32 %s11, 1
    %s17 = ssub.s32 %s11, 2
    %s24 = sadd.s32 1, %s19
    %p25 = scmp.ge.s32.totalorder %s24, 1
    %s26 = scalar_select %p25, 0, %s24
    %s27 = sadd.s32 1, %s18
    %s28 = scalar_select %p25, %s27, %s18
    %p29 = scmp.ge.s32.totalorder %s28, 2
    %s30 = scalar_select %p29, 0, %s28
    %s32 = sadd.s32 %s31, 1
    %p35 = scmp.eq.s32.totalorder %s11, 1
    %p36 = scmp.ne.s32.totalorder %s31, %s33
    %p37 = scmp.eq.s32.totalorder %s11, 0
    %p38 = por %p36, %p37
    %p39 = scmp.ne.s32.totalorder %s31, %s33
    %p40 = scmp.eq.s32.totalorder %s16, 1
    %p41 = por %p39, %p40
    %p42 = scmp.ne.s32.totalorder %s33, %s34
    %p43 = scmp.eq.s32.totalorder %s16, 0
    %p44 = por %p42, %p43
    %p45 = scmp.ne.s32.totalorder %s33, %s34
    %p46 = scmp.eq.s32.totalorder %s17, 1
    %p47 = por %p45, %p46
    %p49 = scmp.ne.s32.totalorder %s34, %s48
    %p50 = scmp.eq.s32.totalorder %s17, 0
    %p51 = por %p49, %p50
    %s53 = sadd.s32 %s52, 1
    %p56 = scmp.eq.s32.totalorder %s11, 1
    %p57 = scmp.ne.s32.totalorder %s52, %s54
    %p58 = scmp.eq.s32.totalorder %s11, 0
    %p59 = por %p57, %p58
    %p60 = scmp.ne.s32.totalorder %s52, %s54
    %p61 = scmp.eq.s32.totalorder %s16, 1
    %p62 = por %p60, %p61
    %p63 = scmp.ne.s32.totalorder %s54, %s55
    %p64 = scmp.eq.s32.totalorder %s16, 0
    %p65 = por %p63, %p64
    %p66 = scmp.ne.s32.totalorder %s54, %s55
    %p67 = scmp.eq.s32.totalorder %s17, 1
    %p68 = por %p66, %p67
    %p70 = scmp.ne.s32.totalorder %s55, %s69
    %p71 = scmp.eq.s32.totalorder %s17, 0
    %p72 = por %p70, %p71
    %s73 = ssub.s32 %s18, %s30
    %s74 = ssub.s32 %s19, %s26
    %s75 = sor.u32 %s73, %s74
    %p76 = scmp.eq.s32.totalorder %s75, 0
    %s78 = sadd.s32 %s77, 1
    %s79 = scalar_select %p76, %s77, %s78
    %p82 = pneg %p76
    %p83 = scmp.eq.s32.totalorder %s11, 1
    %p84 = por %p82, %p83
    %p85 = scmp.ne.s32.totalorder %s77, %s80
    %p86 = scmp.eq.s32.totalorder %s11, 0
    %p87 = por %p85, %p86
    %p88 = scmp.ne.s32.totalorder %s77, %s80
    %p89 = scmp.eq.s32.totalorder %s16, 1
    %p90 = por %p88, %p89
    %p91 = scmp.ne.s32.totalorder %s80, %s81
    %p92 = scmp.eq.s32.totalorder %s16, 0
    %p93 = por %p91, %p92
    %p94 = scmp.ne.s32.totalorder %s80, %s81
    %p95 = scmp.eq.s32.totalorder %s17, 1
    %p96 = por %p94, %p95
    %p98 = scmp.ne.s32.totalorder %s81, %s97
    %p99 = scmp.eq.s32.totalorder %s17, 0
    %p100 = por %p98, %p99
    %s101 = ssub.s32 %s18, %s30
    %p102 = scmp.eq.s32.totalorder %s101, 0
    %s104 = sadd.s32 %s103, 1
    %s105 = scalar_select %p102, %s103, %s104
    %p108 = pneg %p102
    %p109 = scmp.eq.s32.totalorder %s11, 1
    %p110 = por %p108, %p109
    %p111 = scmp.ne.s32.totalorder %s103, %s106
    %p112 = scmp.eq.s32.totalorder %s11, 0
    %p113 = por %p111, %p112
    %p114 = scmp.ne.s32.totalorder %s103, %s106
    %p115 = scmp.eq.s32.totalorder %s16, 1
    %p116 = por %p114, %p115
    %p117 = scmp.ne.s32.totalorder %s106, %s107
    %p118 = scmp.eq.s32.totalorder %s16, 0
    %p119 = por %p117, %p118
    %p120 = scmp.ne.s32.totalorder %s106, %s107
    %p121 = scmp.eq.s32.totalorder %s17, 1
    %p122 = por %p120, %p121
    %p124 = scmp.ne.s32.totalorder %s107, %s123
    %p125 = scmp.eq.s32.totalorder %s17, 0
    %p126 = por %p124, %p125
    %s127 = ssub.s32 %s18, %s30
    %p128 = scmp.eq.s32.totalorder %s127, 0
    %s130 = sadd.s32 %s129, 1
    %s131 = scalar_select %p128, %s129, %s130
    %p134 = pneg %p128
    %p135 = scmp.eq.s32.totalorder %s11, 1
    %p136 = por %p134, %p135
    %p137 = scmp.ne.s32.totalorder %s129, %s132
    %p138 = scmp.eq.s32.totalorder %s11, 0
    %p139 = por %p137, %p138
    %p140 = scmp.ne.s32.totalorder %s129, %s132
    %p141 = scmp.eq.s32.totalorder %s16, 1
    %p142 = por %p140, %p141
    %p143 = scmp.ne.s32.totalorder %s132, %s133
    %p144 = scmp.eq.s32.totalorder %s16, 0
    %p145 = por %p143, %p144
    %p146 = scmp.ne.s32.totalorder %s132, %s133
    %p147 = scmp.eq.s32.totalorder %s17, 1
    %p148 = por %p146, %p147
    %p150 = scmp.ne.s32.totalorder %s133, %s149
    %p151 = scmp.eq.s32.totalorder %s17, 0
    %p152 = por %p150, %p151
    %s153 = ssub.s32 %s18, %s30
    %s154 = ssub.s32 %s19, %s26
    %s155 = sor.u32 %s153, %s154
    %p156 = scmp.eq.s32.totalorder %s155, 0
    %s158 = sadd.s32 %s157, 1
    %s159 = scalar_select %p156, %s157, %s158
    %p162 = pneg %p156
    %p163 = scmp.eq.s32.totalorder %s11, 1
    %p164 = por %p162, %p163
    %p165 = scmp.ne.s32.totalorder %s157, %s160
    %p166 = scmp.eq.s32.totalorder %s11, 0
    %p167 = por %p165, %p166
    %p168 = scmp.ne.s32.totalorder %s157, %s160
    %p169 = scmp.eq.s32.totalorder %s16, 1
    %p170 = por %p168, %p169
    %p171 = scmp.ne.s32.totalorder %s160, %s161
    %p172 = scmp.eq.s32.totalorder %s16, 0
    %p173 = por %p171, %p172
    %p174 = scmp.ne.s32.totalorder %s160, %s161
    %p175 = scmp.eq.s32.totalorder %s17, 1
    %p176 = por %p174, %p175
    %p178 = scmp.ne.s32.totalorder %s161, %s177
    %p179 = scmp.eq.s32.totalorder %s17, 0
    %p180 = por %p178, %p179
    %p181 = scmp.le.s32.totalorder 1, %s11
    %p182 = scmp.lt.s32.totalorder %s11, 3
    %p183 = pnand %p181, %p182
    %p184 = pneg %p183
    // Predicated region
    $region9: #{ufo_attention_forward.8} parent=5 // pred_check
      _
    $region10: #{ufo_attention_forward.8} parent=5 // pred_check_branch
      %186 = sbr.rel (%p183) target = $region12
    $region11: #{ufo_attention_forward.8} parent=5 // pred_region
      %s187 = ssub.s32 %s11, 1
      // Predicated region
      $region13: #{ufo_attention_forward.8} parent=11 // pred_check
        %p188 = pneg %p44
      $region14: #{ufo_attention_forward.8} parent=11 // pred_check_branch
        %190 = sbr.rel (%p188) target = $region16
      $region15: #{ufo_attention_forward.8} parent=11 // pred_region
        _
      $region16: #{ufo_attention_forward.8} parent=11 // pred_fallthru
        _
      // Predicated region
      $region17: #{ufo_attention_forward.8} parent=11 // pred_check
        %p191 = pneg %p65
      $region18: #{ufo_attention_forward.8} parent=11 // pred_check_branch
        %193 = sbr.rel (%p191) target = $region20
      $region19: #{ufo_attention_forward.8} parent=11 // pred_region
        _
      $region20: #{ufo_attention_forward.8} parent=11 // pred_fallthru
        _
    $region12: #{ufo_attention_forward.8} parent=5 // pred_fallthru
      _
    %p194 = scmp.lt.s32.totalorder %s11, 2
    // Predicated region
    $region21: #{ufo_attention_forward.8} parent=5 // pred_check
      %p195 = pneg %p194
    $region22: #{ufo_attention_forward.8} parent=5 // pred_check_branch
      %197 = sbr.rel (%p195) target = $region24
    $region23: #{ufo_attention_forward.8} parent=5 // pred_region
      // Predicated region
      $region25: #{ufo_attention_forward.8} parent=23 // pred_check
        %p198 = pneg %p87
      $region26: #{ufo_attention_forward.8} parent=23 // pred_check_branch
        %200 = sbr.rel (%p198) target = $region28
      $region27: #{ufo_attention_forward.8} parent=23 // pred_region
        %p201 = scmp.lt.s32.totalorder %s18, 1
        %s202 = scalar_select %p201, %s18, 1
        %p203 = scmp.lt.s32.totalorder %s19, 0
        %s204 = scalar_select %p203, %s19, 0
        %s205 = sadd.s32 %s204, %s202
        %s206 = smul.addr %s205, 8
        %s207 = scalar_lea.vmem %s2, %s206
      $region28: #{ufo_attention_forward.8} parent=23 // pred_fallthru
        _
      // Predicated region
      $region29: #{ufo_attention_forward.8} parent=23 // pred_check
        %p208 = pneg %p113
      $region30: #{ufo_attention_forward.8} parent=23 // pred_check_branch
        %210 = sbr.rel (%p208) target = $region32
      $region31: #{ufo_attention_forward.8} parent=23 // pred_region
        %p211 = scmp.lt.s32.totalorder %s18, 1
        %s212 = scalar_select %p211, %s18, 1
        %s213 = smul.addr %s212, 8
        %s214 = scalar_lea.vmem %s3, %s213
      $region32: #{ufo_attention_forward.8} parent=23 // pred_fallthru
        _
      // Predicated region
      $region33: #{ufo_attention_forward.8} parent=23 // pred_check
        %p215 = pneg %p139
      $region34: #{ufo_attention_forward.8} parent=23 // pred_check_branch
        %217 = sbr.rel (%p215) target = $region36
      $region35: #{ufo_attention_forward.8} parent=23 // pred_region
        %p218 = scmp.lt.s32.totalorder %s18, 1
        %s219 = scalar_select %p218, %s18, 1
        %s220 = smul.addr %s219, 8
        %s221 = scalar_lea.vmem %s4, %s220
      $region36: #{ufo_attention_forward.8} parent=23 // pred_fallthru
        _
    $region24: #{ufo_attention_forward.8} parent=5 // pred_fallthru
      _
    %p222 = scmp.le.s32.totalorder 1, %s11
    %p223 = scmp.lt.s32.totalorder %s11, 3
    %p224 = pnand %p222, %p223
    %p225 = pneg %p224
    // Predicated region
    $region37: #{ufo_attention_forward.8} parent=5 // pred_check
      _
    $region38: #{ufo_attention_forward.8} parent=5 // pred_check_branch
      %227 = sbr.rel (%p224) target = $region40
    $region39: #{ufo_attention_forward.8} parent=5 // pred_region
      %s228 = ssub.s32 %s11, 1
      %p229 = pneg %p44
      %p230 = pneg %p41
      %p231 = pneg %p65
      %p232 = pneg %p62
      %p233 = scmp.lt.s32.totalorder %s20, 1
      %s234 = scalar_select %p233, %s20, 1
      %p235 = scmp.lt.s32.totalorder %s21, 0
      %s236 = scalar_select %p235, %s21, 0
      %s237 = sadd.s32 %s236, %s234
      %s238 = smul.addr %s237, 8
      %s239 = scalar_lea.vmem %s2, %s238
      %p240 = pneg %p93
      %p241 = pneg %p90
      %p242 = scmp.lt.s32.totalorder %s20, 1
      %s243 = scalar_select %p242, %s20, 1
      %s244 = smul.addr %s243, 8
      %s245 = scalar_lea.vmem %s3, %s244
      %p246 = pneg %p119
      %p247 = pneg %p116
      %p248 = scmp.lt.s32.totalorder %s20, 1
      %s249 = scalar_select %p248, %s20, 1
      %s250 = smul.addr %s249, 8
      %s251 = scalar_lea.vmem %s4, %s250
      %p252 = pneg %p145
      %p253 = pneg %p142
      %p254 = pneg %p173
      %p255 = pneg %p170
      %p256 = scmp.lt.s32.totalorder %s20, 1
      %s257 = scalar_select %p256, %s20, 1
      %p258 = scmp.lt.s32.totalorder %s21, 0
      %s259 = scalar_select %p258, %s21, 0
      %s260 = sadd.s32 %s259, %s257
      %s261 = smul.addr %s260, 8
      %s262 = scalar_lea.vmem %s5, %s261
      %p263 = scmp.lt.s32.totalorder %s20, 1
      %s264 = scalar_select %p263, %s20, 1
      %p265 = scmp.lt.s32.totalorder %s21, 0
      %s266 = scalar_select %p265, %s21, 0
      %s267 = sadd.s32 %s266, %s264
      %s268 = smul.addr %s267, 8
      %s269 = scalar_lea.vmem %s2, %s268
      %p270 = scmp.lt.s32.totalorder %s20, 1
      %s271 = scalar_select %p270, %s20, 1
      %s272 = smul.addr %s271, 8
      %s273 = scalar_lea.vmem %s3, %s272
      %p274 = scmp.lt.s32.totalorder %s20, 1
      %s275 = scalar_select %p274, %s20, 1
      %s276 = smul.addr %s275, 8
      %s277 = scalar_lea.vmem %s4, %s276
      %p278 = scmp.lt.s32.totalorder %s20, 1
      %s279 = scalar_select %p278, %s20, 1
      %p280 = scmp.lt.s32.totalorder %s21, 0
      %s281 = scalar_select %p280, %s21, 0
      %s282 = sadd.s32 %s281, %s279
      %s283 = smul.addr %s282, 8
      %s284 = scalar_lea.vmem %s5, %s283
      %p285 = scmp.eq.s32.totalorder %s21, 0
      // Predicated region
      $region41: #{ufo_attention_forward.8} parent=39 // pred_check
        %p286 = pneg %p285
      $region42: #{ufo_attention_forward.8} parent=39 // pred_check_branch
        %288 = sbr.rel (%p286) target = $region44
      $region43: #{ufo_attention_forward.8} parent=39 // pred_region
        %v289 = vld [vmem:[%s277] sm:$0xff]
        %v290 = vld [vmem:[%s273] sm:$0xff]
        %291 = vxpose.xlu0.b32.start [1/16] %v289, 128
        %292 = vxpose.xlu0.b32.cont [2/16] 0.0, 128
        %293 = vxpose.xlu0.b32.cont [3/16] 0.0, 128
        %294 = vxpose.xlu0.b32.cont [4/16] 0.0, 128
        %295 = vxpose.xlu0.b32.cont [5/16] 0.0, 128
        %296 = vxpose.xlu0.b32.cont [6/16] 0.0, 128
        %297 = vxpose.xlu0.b32.cont [7/16] 0.0, 128
        %298 = vxpose.xlu0.b32.cont [8/16] 0.0, 128
        %299 = vxpose.xlu0.b32.cont [9/16] 0.0, 128
        %300 = vxpose.xlu0.b32.cont [10/16] 0.0, 128
        %301 = vxpose.xlu0.b32.cont [11/16] 0.0, 128
        %302 = vxpose.xlu0.b32.cont [12/16] 0.0, 128
        %303 = vxpose.xlu0.b32.cont [13/16] 0.0, 128
        %304 = vxpose.xlu0.b32.cont [14/16] 0.0, 128
        %305 = vxpose.xlu0.b32.cont [15/16] 0.0, 128
        %306 = vxpose.xlu0.b32.end [16/16] 0.0, 128
        %v307 = vpop.trf.xlu0
        %v308 = vpop.trf.xlu0
        %v309 = vpop.trf.xlu0
        %v310 = vpop.trf.xlu0
        %v311 = vpop.trf.xlu0
        %v312 = vpop.trf.xlu0
        %v313 = vpop.trf.xlu0
        %v314 = vpop.trf.xlu0
        %v315 = vpop.trf.xlu0
        %v316 = vpop.trf.xlu0
        %v317 = vpop.trf.xlu0
        %v318 = vpop.trf.xlu0
        %v319 = vpop.trf.xlu0
        %v320 = vpop.trf.xlu0
        %v321 = vpop.trf.xlu0
        %v322 = vpop.trf.xlu0
        %vm323 = vcmask 64512
        %v325 = vsel %vm323, %v307, 0
        %v328 = vsel %vm323, %v308, 0
        %v331 = vsel %vm323, %v309, 0
        %v334 = vsel %vm323, %v310, 0
        %v337 = vsel %vm323, %v311, 0
        %v340 = vsel %vm323, %v312, 0
        %v343 = vsel %vm323, %v313, 0
        %v346 = vsel %vm323, %v314, 0
        %348 = vmatpush.msra.mxu0 0.0
        %349 = vmatpush.msra.mxu0 0.0
        %350 = vmatpush.msra.mxu0 0.0
        %351 = vmatpush.msra.mxu0 0.0
        %352 = vmatpush.msra.mxu0 0.0
        %353 = vmatpush.msra.mxu0 0.0
        %354 = vmatpush.msra.mxu0 0.0
        %355 = vmatpush.msra.mxu0 0.0
        %356 = vmatpush.msra.mxu0 0.0
        %357 = vmatpush.msra.mxu0 0.0
        %358 = vmatpush.msra.mxu0 0.0
        %359 = vmatpush.msra.mxu0 0.0
        %360 = vmatpush.msra.mxu0 0.0
        %361 = vmatpush.msra.mxu0 0.0
        %362 = vmatpush.msra.mxu0 0.0
        %363 = vmatpush.msra.mxu0 %v290
        %364 = vmatmul.f32.gmra.mxu0 %v325
        %v365 = vpop.f32.mrf.mxu0
        %v366 = vadd.f32 0.0, %v365
        %367 = vmatmul.f32.gmra.mxu0 %v328
        %v368 = vpop.f32.mrf.mxu0
        %v369 = vadd.f32 0.0, %v368
        %370 = vmatmul.f32.gmra.mxu0 %v331
        %v371 = vpop.f32.mrf.mxu0
        %v372 = vadd.f32 0.0, %v371
        %373 = vmatmul.f32.gmra.mxu0 %v334
        %v374 = vpop.f32.mrf.mxu0
        %v375 = vadd.f32 0.0, %v374
        %376 = vmatmul.f32.gmra.mxu0 %v337
        %v377 = vpop.f32.mrf.mxu0
        %v378 = vadd.f32 0.0, %v377
        %379 = vmatmul.f32.gmra.mxu0 %v340
        %v380 = vpop.f32.mrf.mxu0
        %v381 = vadd.f32 0.0, %v380
        %382 = vmatmul.f32.gmra.mxu0 %v343
        %v383 = vpop.f32.mrf.mxu0
        %v384 = vadd.f32 0.0, %v383
        %385 = vmatmul.f32.gmra.mxu0 %v346
        %v386 = vpop.f32.mrf.mxu0
        %v387 = vadd.f32 0.0, %v386
        %388 = vdwg.mxu0
        %v389 = vld [vmem:[%s0] sm:$0xff]
        %v390 = vld [vmem:[%s0 + $0x8] sm:$0xff]
        %v391 = vld [vmem:[%s0 + $0x10] sm:$0xff]
        %v392 = vld [vmem:[%s0 + $0x18] sm:$0xff]
        %v393 = vld [vmem:[%s0 + $0x20] sm:$0xff]
        %v394 = vld [vmem:[%s0 + $0x28] sm:$0xff]
        %v395 = vld [vmem:[%s0 + $0x30] sm:$0xff]
        %v396 = vld [vmem:[%s0 + $0x38] sm:$0xff]
        %v397 = vmul.f32 %v366, %v389
        %v398 = vmul.f32 %v369, %v390
        %v399 = vmul.f32 %v372, %v391
        %v400 = vmul.f32 %v375, %v392
        %v401 = vmul.f32 %v378, %v393
        %v402 = vmul.f32 %v381, %v394
        %v403 = vmul.f32 %v384, %v395
        %v404 = vmul.f32 %v387, %v396
        %v405 = vmul.f32 %v397, %v397
        %v406 = vmul.f32 %v398, %v398
        %v407 = vmul.f32 %v399, %v399
        %v408 = vmul.f32 %v400, %v400
        %v409 = vmul.f32 %v401, %v401
        %v410 = vmul.f32 %v402, %v402
        %v411 = vmul.f32 %v403, %v403
        %v412 = vmul.f32 %v404, %v404
        %vm413 = vcmask 523264
        %v414 = vsel %vm413, %v405, 0.0
        %v415 = vsel %vm413, %v406, 0.0
        %v416 = vadd.f32 %v414, %v415
        %v417 = vsel %vm413, %v407, 0.0
        %v418 = vadd.f32 %v416, %v417
        %v419 = vsel %vm413, %v408, 0.0
        %v420 = vadd.f32 %v418, %v419
        %v421 = vsel %vm413, %v409, 0.0
        %v422 = vadd.f32 %v420, %v421
        %v423 = vsel %vm413, %v410, 0.0
        %v424 = vadd.f32 %v422, %v423
        %v425 = vsel %vm413, %v411, 0.0
        %v426 = vadd.f32 %v424, %v425
        %v427 = vsel %vm413, %v412, 0.0
        %v428 = vadd.f32 %v426, %v427
        %v429 = vrot.slane %v428, 4
        %v430 = vadd.f32 %v428, %v429
        %v431 = vrot.slane %v430, 2
        %v432 = vadd.f32 %v430, %v431
        %v433 = vrot.slane %v432, 1
        %v434 = vadd.f32 %v432, %v433
        %v435 = vld [vmem:[%s1] sm:$0x1]
        %v436 = vrsqrt.pop %v434
        %v437 = vmul.f32 %v436, %v434
        %v438 = vmul.f32 %v437, %v436
        %v439 = vmul.f32 0.5, %v438
        %v440 = vsub.f32 1.5, %v439
        %v441 = vmul.f32 %v436, %v440
        %vm442 = vweird.f32 %v434
        %vm443 = vweird.f32 %v436
        %vm444 = vmor %vm442, %vm443
        %v445 = vsel %vm444, %v436, %v441
        %v446 = vmul.f32 %v435, %v445
        %v448 = vperm.slane %v446, 0
        %v450 = vmul.f32 %v397, %v448
        %v451 = vmul.f32 %v398, %v448
        %v452 = vmul.f32 %v399, %v448
        %v453 = vmul.f32 %v400, %v448
        %v454 = vmul.f32 %v401, %v448
        %v455 = vmul.f32 %v402, %v448
        %v456 = vmul.f32 %v403, %v448
        %v457 = vmul.f32 %v404, %v448
        %458 = vst.msk [vmem:[#allocation2] sm:$0xff] %vm413, %v450
        %459 = vst.msk [vmem:[#allocation2 + $0x8] sm:$0xff] %vm413, %v451
        %460 = vst.msk [vmem:[#allocation2 + $0x10] sm:$0xff] %vm413, %v452
        %461 = vst.msk [vmem:[#allocation2 + $0x18] sm:$0xff] %vm413, %v453
        %462 = vst.msk [vmem:[#allocation2 + $0x20] sm:$0xff] %vm413, %v454
        %463 = vst.msk [vmem:[#allocation2 + $0x28] sm:$0xff] %vm413, %v455
        %464 = vst.msk [vmem:[#allocation2 + $0x30] sm:$0xff] %vm413, %v456
        %465 = vst.msk [vmem:[#allocation2 + $0x38] sm:$0xff] %vm413, %v457
      $region44: #{ufo_attention_forward.8} parent=39 // pred_fallthru
        _
      %v466 = vld [vmem:[%s269] sm:$0xff]
      %v467 = vmul.f32 %v466, %v466
      %v468 = vld [vmem:[%s0] sm:$0xff]
      %v469 = vld [vmem:[%s0 + $0x8] sm:$0xff]
      %v470 = vld [vmem:[%s0 + $0x10] sm:$0xff]
      %v471 = vld [vmem:[%s0 + $0x18] sm:$0xff]
      %v472 = vld [vmem:[%s0 + $0x20] sm:$0xff]
      %v473 = vld [vmem:[%s0 + $0x28] sm:$0xff]
      %v474 = vld [vmem:[%s0 + $0x30] sm:$0xff]
      %v475 = vld [vmem:[%s0 + $0x38] sm:$0xff]
      %vm476 = vcmask 523264
      %v478 = vsel %vm476, %v467, 0
      %480 = vmatpush.msra.mxu0 0.0
      %481 = vmatpush.msra.mxu0 0.0
      %482 = vmatpush.msra.mxu0 0.0
      %483 = vmatpush.msra.mxu0 0.0
      %484 = vmatpush.msra.mxu0 0.0
      %485 = vmatpush.msra.mxu0 0.0
      %486 = vmatpush.msra.mxu0 0.0
      %487 = vmatpush.msra.mxu0 0.0
      %488 = vmatpush.msra.mxu0 %v475
      %489 = vmatpush.msra.mxu0 %v474
      %490 = vmatpush.msra.mxu0 %v473
      %491 = vmatpush.msra.mxu0 %v472
      %492 = vmatpush.msra.mxu0 %v471
      %493 = vmatpush.msra.mxu0 %v470
      %494 = vmatpush.msra.mxu0 %v469
      %495 = vmatpush.msra.mxu0 %v468
      %496 = vmatmul.f32.gmra.mxu0 %v478
      %v497 = vpop.f32.mrf.mxu0
      %v498 = vadd.f32 0.0, %v497
      %499 = vdwg.mxu0
      %v500 = vrsqrt.pop %v498
      %v501 = vmul.f32 %v500, %v498
      %v502 = vmul.f32 %v501, %v500
      %v503 = vmul.f32 0.5, %v502
      %v504 = vsub.f32 1.5, %v503
      %v505 = vmul.f32 %v500, %v504
      %vm506 = vweird.f32 %v498
      %vm507 = vweird.f32 %v500
      %vm508 = vmor %vm506, %vm507
      %v509 = vsel %vm508, %v500, %v505
      %v510 = vmul.f32 %v466, %v509
      %v511 = vld [vmem:[#allocation2] sm:$0xff]
      %v512 = vld [vmem:[#allocation2 + $0x8] sm:$0xff]
      %v513 = vld [vmem:[#allocation2 + $0x10] sm:$0xff]
      %v514 = vld [vmem:[#allocation2 + $0x18] sm:$0xff]
      %v515 = vld [vmem:[#allocation2 + $0x20] sm:$0xff]
      %v516 = vld [vmem:[#allocation2 + $0x28] sm:$0xff]
      %v517 = vld [vmem:[#allocation2 + $0x30] sm:$0xff]
      %v518 = vld [vmem:[#allocation2 + $0x38] sm:$0xff]
      %v520 = vsel %vm476, %v510, 0
      %522 = vmatpush.msra.mxu0 0.0
      %523 = vmatpush.msra.mxu0 0.0
      %524 = vmatpush.msra.mxu0 0.0
      %525 = vmatpush.msra.mxu0 0.0
      %526 = vmatpush.msra.mxu0 0.0
      %527 = vmatpush.msra.mxu0 0.0
      %528 = vmatpush.msra.mxu0 0.0
      %529 = vmatpush.msra.mxu0 0.0
      %530 = vmatpush.msra.mxu0 %v518
      %531 = vmatpush.msra.mxu0 %v517
      %532 = vmatpush.msra.mxu0 %v516
      %533 = vmatpush.msra.mxu0 %v515
      %534 = vmatpush.msra.mxu0 %v514
      %535 = vmatpush.msra.mxu0 %v513
      %536 = vmatpush.msra.mxu0 %v512
      %537 = vmatpush.msra.mxu0 %v511
      %538 = vmatmul.f32.gmra.mxu0 %v520
      %v539 = vpop.f32.mrf.mxu0
      %v540 = vadd.f32 0.0, %v539
      %541 = vdwg.mxu0
      %542 = vst.msk [vmem:[%s284] sm:$0xff] %vm476, %v540
      %p543 = scmp.lt.s32.totalorder %s20, 1
      %s544 = scalar_select %p543, %s20, 1
      %p545 = scmp.lt.s32.totalorder %s21, 0
      %s546 = scalar_select %p545, %s21, 0
      %s547 = sadd.s32 %s546, %s544
      %s548 = smul.addr %s547, 8
      %s549 = scalar_lea.vmem %s5, %s548
      // Predicated region
      $region45: #{ufo_attention_forward.8} parent=39 // pred_check
        %p550 = pneg %p170
      $region46: #{ufo_attention_forward.8} parent=39 // pred_check_branch
        %552 = sbr.rel (%p550) target = $region48
      $region47: #{ufo_attention_forward.8} parent=39 // pred_region
        _
      $region48: #{ufo_attention_forward.8} parent=39 // pred_fallthru
        _
    $region40: #{ufo_attention_forward.8} parent=5 // pred_fallthru
      _
    %p553 = scmp.le.s32.totalorder 2, %s11
    // Predicated region
    $region49: #{ufo_attention_forward.8} parent=5 // pred_check
      %p554 = pneg %p553
    $region50: #{ufo_attention_forward.8} parent=5 // pred_check_branch
      %556 = sbr.rel (%p554) target = $region52
    $region51: #{ufo_attention_forward.8} parent=5 // pred_region
      %s557 = ssub.s32 %s11, 2
      // Predicated region
      $region53: #{ufo_attention_forward.8} parent=51 // pred_check
        %p558 = pneg %p176
      $region54: #{ufo_attention_forward.8} parent=51 // pred_check_branch
        %560 = sbr.rel (%p558) target = $region56
      $region55: #{ufo_attention_forward.8} parent=51 // pred_region
        %p561 = scmp.lt.s32.totalorder %s22, 1
        %s562 = scalar_select %p561, %s22, 1
        %p563 = scmp.lt.s32.totalorder %s23, 0
        %s564 = scalar_select %p563, %s23, 0
        %s565 = sadd.s32 %s564, %s562
        %s566 = smul.addr %s565, 8
        %s567 = scalar_lea.vmem %s5, %s566
      $region56: #{ufo_attention_forward.8} parent=51 // pred_fallthru
        _
    $region52: #{ufo_attention_forward.8} parent=5 // pred_fallthru
      _
  $region6: #{ufo_attention_forward.8} parent=0 // loop_footer
    %s15 = sadd.s32 1, %s11
  $region7: #{ufo_attention_forward.8} parent=0 // loop_footer_branch
    %10 = sbr.rel target = $region3
  $region8: #{ufo_attention_forward.8} parent=0 // loop_exit
    _

</llo_original>
